<compile_context>
chip_gen: v5e
topology: v5e:2x2
jax: 0.10.0
libtpu: 0.0.40
codegen_flags: <defaults>
</compile_context>

<pallas_src>
import functools

import jax
import jax.numpy as jnp
from jax.experimental import pallas as pl
from jax.experimental.pallas import tpu as pltpu


def _round_up(x, m):
    return (x + m - 1) // m * m


def _cdiv(a, b):
    return (a + b - 1) // b


def _ce_epilogue(logits, y_ref, o_ref, *, batch, tile_b, mask_rows, row_offset):
    """Softmax-CE per row of f32 logits; store the tile's loss sum lane-dense."""
    m = jnp.max(logits, axis=-1, keepdims=True)                         # (TB, 1)
    lse = m + jnp.log(jnp.sum(jnp.exp(logits - m), axis=-1, keepdims=True))
    cls = jax.lax.broadcasted_iota(jnp.int32, logits.shape, 1)          # (TB, Cp)
    picked = jnp.sum(jnp.where(cls == y_ref[...], logits, 0.0),
                     axis=-1, keepdims=True)                            # (TB, 1)
    per_example = lse - picked
    if mask_rows:  # static: only emitted when the batch axis was padded
        row = jax.lax.broadcasted_iota(jnp.int32, (tile_b, 1), 0) + row_offset
        per_example = jnp.where(row < batch, per_example, 0.0)
    o_ref[...] = jnp.full(o_ref.shape, jnp.sum(per_example), dtype=jnp.float32)


def _fused_kernel(x_ref, w_ref, b_ref, y_ref, o_ref, *, batch, tile_b,
                  mask_rows, precision):
    # nk == 1 fast path: weights resident, no accumulator scratch.
    row_offset = pl.program_id(0) * tile_b if mask_rows else 0
    logits = jnp.dot(x_ref[...], w_ref[...],
                     preferred_element_type=jnp.float32,
                     precision=precision) + b_ref[...]
    _ce_epilogue(logits, y_ref, o_ref, batch=batch, tile_b=tile_b,
                 mask_rows=mask_rows, row_offset=row_offset)


def _acc_kernel(x_ref, w_ref, b_ref, y_ref, o_ref, acc_ref, *, batch, tile_b,
                mask_rows, nk, precision):
    # K-tiled path: resident f32 accumulator, init/finalize via pl.when.
    # NOTE: pl.program_id is hoisted out of the pl.when bodies (lowering fix).
    k = pl.program_id(1)
    row_offset = pl.program_id(0) * tile_b if mask_rows else 0

    @pl.when(k == 0)
    def _():
        acc_ref[...] = jnp.zeros_like(acc_ref)

    acc_ref[...] += jnp.dot(x_ref[...], w_ref[...],
                            preferred_element_type=jnp.float32,
                            precision=precision)

    @pl.when(k == nk - 1)
    def _():
        _ce_epilogue(acc_ref[...] + b_ref[...], y_ref, o_ref, batch=batch,
                     tile_b=tile_b, mask_rows=mask_rows, row_offset=row_offset)


class WithLoss:
    """WithLoss(backbone=Linear(w, b), loss_fn=softmax_cross_entropy_with_logits).

    forward(data, label) = mean_i CE(softmax(data @ w + b)_i, label_i).
    Parameters are padded once at construction; forward only pads activations
    when the batch / feature dims are not already tile-aligned.
    """

    def __init__(self, w, b, *, compute_dtype=None, tile_b=256,
                 vmem_budget_bytes=40 * 1024 * 1024):
        w = jnp.asarray(w)
        b = jnp.reshape(jnp.asarray(b), (-1,))
        self.D, self.C = w.shape

        mm = (jnp.dtype(compute_dtype) if compute_dtype is not None
              else jnp.dtype(w.dtype))
        if mm not in (jnp.dtype(jnp.float32), jnp.dtype(jnp.bfloat16)):
            mm = jnp.dtype(jnp.float32)
        self.mm_dtype = mm
        self.sublane = 16 if mm == jnp.dtype(jnp.bfloat16) else 8
        self.tile_b = max(self.sublane, _round_up(tile_b, self.sublane))
        self.budget = int(vmem_budget_bytes)
        self.Cp = _round_up(self.C, 128)
        item = mm.itemsize
        Dp_full = _round_up(self.D, 128)
        TBn = self.tile_b  # nominal (max) batch tile used for budget sizing

        def need(tb, tk, with_acc):
            n = 2 * tb * tk * item          # x tiles (double buffered)
            n += 2 * tk * self.Cp * item    # w tiles
            n += 2 * 8 * self.Cp * 4        # bias (resident)
            n += 2 * tb * 128 * 4           # labels (lane-padded in VMEM)
            n += 2 * 8 * 128 * 4            # output block
            n += tb * self.Cp * 4           # f32 logits epilogue temp
            if with_acc:
                n += tb * self.Cp * 4       # accumulator scratch
            return n

        self._need = need
        if need(TBn, Dp_full, False) <= self.budget:
            TK = Dp_full                    # weights fully resident -> nk == 1
        else:
            fixed = need(TBn, 0, True)
            per_tk = 2 * (TBn + self.Cp) * item
            avail = max(self.budget - fixed, per_tk * 128)
            tk_cap = max(128, (avail // per_tk) // 128 * 128)
            nk = _cdiv(Dp_full, tk_cap)
            TK = _round_up(_cdiv(Dp_full, nk), 128)
        self.TK = TK
        self.Dp = _round_up(self.D, TK)
        self.nk = self.Dp // TK

        # Padded parameters (done once, hoisted out of forward). Padded class
        # columns: zero weights + -1e30 bias -> drop out of log-sum-exp exactly.
        self.wp = (jnp.zeros((self.Dp, self.Cp), mm)
                   .at[:self.D, :self.C].set(w.astype(mm)))
        self.bp = (jnp.full((1, self.Cp), -1e30, jnp.float32)
                   .at[0, :self.C].set(b.astype(jnp.float32)))
        self.precision = (jax.lax.Precision.HIGHEST
                          if mm == jnp.dtype(jnp.float32)
                          else jax.lax.Precision.DEFAULT)

    @property
    def backbone_network(self):
        return (self.wp[:self.D, :self.C], self.bp[0, :self.C])

    def __call__(self, data, label):
        return self.forward(data, label)

    def forward(self, data, label):
        B, D = data.shape
        assert D == self.D, (D, self.D)
        mm = self.mm_dtype
        sub = self.sublane

        # Batch tiling: minimize padding; keep >= 2 tiles when B allows so both
        # v7x TensorCores get work via the "parallel" batch axis.
        nb = max(1, _cdiv(B, self.tile_b))
        if B >= 2 * sub:
            nb = max(nb, 2)
        TB = _round_up(_cdiv(B, nb), sub)
        nb = _cdiv(B, TB)
        Bp = nb * TB
        mask_rows = Bp != B

        # Pad activations / labels only when needed.
        if Bp == B and self.Dp == D and data.dtype == mm:
            xp = data
        else:
            xp = jnp.zeros((Bp, self.Dp), mm).at[:B, :D].set(data.astype(mm))
        if Bp == B:
            yp = label.astype(jnp.int32).reshape(B, 1)
        else:
            yp = jnp.zeros((Bp, 1), jnp.int32).at[:B, 0].set(
                label.astype(jnp.int32))

        nk = self.nk
        need = self._need(TB, self.TK, nk > 1)
        vmem_limit = int(min(max(need + (8 << 20), 16 << 20), 48 << 20))

        if nk == 1:
            kernel = functools.partial(
                _fused_kernel, batch=B, tile_b=TB, mask_rows=mask_rows,
                precision=self.precision)
            scratch = []
        else:
            kernel = functools.partial(
                _acc_kernel, batch=B, tile_b=TB, mask_rows=mask_rows, nk=nk,
                precision=self.precision)
            scratch = [pltpu.VMEM((TB, self.Cp), jnp.float32)]

        partials = pl.pallas_call(
            kernel,
            out_shape=jax.ShapeDtypeStruct((1, nb * 128), jnp.float32),
            grid_spec=pltpu.PrefetchScalarGridSpec(
                num_scalar_prefetch=0,
                grid=(nb, nk),
                in_specs=[
                    pl.BlockSpec((TB, self.TK), lambda i, k: (i, k)),      # x
                    pl.BlockSpec((self.TK, self.Cp), lambda i, k: (k, 0)),  # W (resident when nk==1)
                    pl.BlockSpec((1, self.Cp), lambda i, k: (0, 0)),        # bias (resident)
                    pl.BlockSpec((TB, 1), lambda i, k: (i, 0)),             # labels
                ],
                out_specs=pl.BlockSpec((1, 128), lambda i, k: (0, i)),
                scratch_shapes=scratch,
            ),
            compiler_params=pltpu.CompilerParams(
                dimension_semantics=("parallel", "arbitrary"),
                vmem_limit_bytes=vmem_limit,
            ),
        )(xp, self.wp, self.bp, yp)

        per_tile = partials.reshape(nb, 128)[:, 0]
        return jnp.sum(per_tile) / B


def _reference(data, w, b, labels):
    logits = (data.astype(jnp.float32) @ w.astype(jnp.float32)
              + jnp.reshape(b, (1, -1)).astype(jnp.float32))
    lse = jax.scipy.special.logsumexp(logits, axis=-1)
    picked = jnp.take_along_axis(logits, labels[:, None], axis=-1)[:, 0]
    return jnp.mean(lse - picked)


if __name__ == "__main__":
    key = jax.random.PRNGKey(0)

    # Case 1: toy shapes (single batch tile; exercises D/C padding, nk==1 path).
    B, D, C = 8, 32, 16
    k1, k2, k3, k4, key = jax.random.split(key, 5)
    data = jax.random.normal(k1, (B, D), dtype=jnp.float32)
    w = jax.random.normal(k2, (D, C), dtype=jnp.float32) * 0.1
    b = jax.random.normal(k3, (1, C), dtype=jnp.float32) * 0.01
    labels = jax.random.randint(k4, (B,), 0, C, dtype=jnp.int32)

    net_with_loss = WithLoss(w, b)
    loss = net_with_loss(data, labels)
    jax.block_until_ready(loss)
    ref = _reference(data, w, b, labels)
    assert jnp.allclose(loss, ref, atol=1e-4, rtol=1e-4), (loss, ref)

    # Case 2: multi-batch-tile grid (2 parallel batch tiles, padded B and C).
    B, D, C = 300, 640, 200
    k1, k2, k3, k4, key = jax.random.split(key, 5)
    data = jax.random.normal(k1, (B, D), dtype=jnp.float32)
    w = jax.random.normal(k2, (D, C), dtype=jnp.float32) * 0.05
    b = jax.random.normal(k3, (1, C), dtype=jnp.float32) * 0.01
    labels = jax.random.randint(k4, (B,), 0, C, dtype=jnp.int32)

    net_with_loss = WithLoss(w, b)
    loss = net_with_loss(data, labels)
    jax.block_until_ready(loss)
    ref = _reference(data, w, b, labels)
    assert jnp.allclose(loss, ref, atol=1e-3, rtol=1e-3), (loss, ref)

    # Case 3: bf16 matmul inputs (MXU fast path; f32 accumulate + f32 LSE).
    net_bf16 = WithLoss(w, b, compute_dtype=jnp.bfloat16)
    loss_bf16 = net_bf16(data, labels)
    jax.block_until_ready(loss_bf16)
    assert jnp.allclose(loss_bf16, ref, atol=5e-2, rtol=5e-2), (loss_bf16, ref)

    # Case 4: tiny VMEM budget forces the K-tiled accumulator path (nk > 1).
    net_small_vmem = WithLoss(w, b, tile_b=128,
                              vmem_budget_bytes=2 * 1024 * 1024)
    loss_kt = net_small_vmem(data, labels)
    jax.block_until_ready(loss_kt)
    assert jnp.allclose(loss_kt, ref, atol=1e-3, rtol=1e-3), (loss_kt, ref)

    print("KERNEL_OK")
</pallas_src>

<mosaic_0001>
module attributes {stable_mosaic.version = 11 : i64} {
  func.func @_fused_kernel(%arg0: i32, %arg1: i32, %arg2: memref<8x128xf32, #tpu.memory_space<vmem>>, %arg3: memref<128x128xf32, #tpu.memory_space<vmem>>, %arg4: memref<1x128xf32, #tpu.memory_space<vmem>>, %arg5: memref<8x1xi32, #tpu.memory_space<vmem>>, %arg6: memref<1x128xf32, #tpu.memory_space<vmem>>) attributes {dimension_semantics = [#tpu.dimension_semantics<parallel>, #tpu.dimension_semantics<arbitrary>], iteration_bounds = array<i64: 1, 1>, scalar_prefetch = 0 : i64, scratch_operands = 0 : i64, tpu.core_type = #tpu.core_type<tc>, window_params = [{transform_indices = @transform_0, window_bounds = array<i64: 8, 128>}, {transform_indices = @transform_1, window_bounds = array<i64: 128, 128>}, {pipeline_mode = #tpu.pipeline_mode<synchronous>, transform_indices = @transform_2, window_bounds = array<i64: 1, 128>}, {transform_indices = @transform_3, window_bounds = array<i64: 8, 1>}, {transform_indices = @transform_4, window_bounds = array<i64: 1, 128>}]} {
    %c0 = arith.constant 0 : index
    %c0_0 = arith.constant 0 : index
    %0 = vector.load %arg2[%c0, %c0_0] : memref<8x128xf32, #tpu.memory_space<vmem>>, vector<8x128xf32>
    %c0_1 = arith.constant 0 : index
    %c0_2 = arith.constant 0 : index
    %1 = vector.load %arg3[%c0_1, %c0_2] : memref<128x128xf32, #tpu.memory_space<vmem>>, vector<128x128xf32>
    %cst = arith.constant dense<0.000000e+00> : vector<8x128xf32>
    %2 = tpu.matmul %0, %1, %cst {dimension_numbers = #tpu.dot_dimension_numbers<[1], [0], [0], [1], [0, 0, 1, 1], [], []>, precision = #tpu.contract_precision<fp32>} : vector<8x128xf32>, vector<128x128xf32>, vector<8x128xf32> -> vector<8x128xf32>
    %c0_3 = arith.constant 0 : index
    %c0_4 = arith.constant 0 : index
    %3 = vector.load %arg4[%c0_3, %c0_4] : memref<1x128xf32, #tpu.memory_space<vmem>>, vector<1x128xf32>
    %4 = vector.broadcast %3 : vector<1x128xf32> to vector<8x128xf32>
    %5 = arith.addf %2, %4 : vector<8x128xf32>
    %cst_5 = arith.constant dense<0xFF800000> : vector<8xf32>
    %6 = vector.multi_reduction <maximumf>, %5, %cst_5 [1] : vector<8x128xf32> to vector<8xf32>
    %7 = vector.shape_cast %6 : vector<8xf32> to vector<8x1xf32>
    %8 = vector.broadcast %7 : vector<8x1xf32> to vector<8x128xf32>
    %9 = arith.subf %5, %8 : vector<8x128xf32>
    %10 = math.exp %9 : vector<8x128xf32>
    %cst_6 = arith.constant dense<0.000000e+00> : vector<8xf32>
    %11 = vector.multi_reduction <add>, %10, %cst_6 [1] : vector<8x128xf32> to vector<8xf32>
    %12 = vector.shape_cast %11 : vector<8xf32> to vector<8x1xf32>
    %13 = math.log %12 : vector<8x1xf32>
    %14 = arith.addf %7, %13 : vector<8x1xf32>
    %15 = tpu.iota {dimensions = array<i32: 1>} : vector<8x128xi32>
    %c0_7 = arith.constant 0 : index
    %c0_8 = arith.constant 0 : index
    %16 = vector.load %arg5[%c0_7, %c0_8] : memref<8x1xi32, #tpu.memory_space<vmem>>, vector<8x1xi32>
    %17 = vector.broadcast %16 : vector<8x1xi32> to vector<8x128xi32>
    %18 = arith.cmpi eq, %15, %17 : vector<8x128xi32>
    %cst_9 = arith.constant 0.000000e+00 : f32
    %19 = vector.broadcast %cst_9 : f32 to vector<8x128xf32>
    %20 = arith.select %18, %5, %19 : vector<8x128xi1>, vector<8x128xf32>
    %cst_10 = arith.constant dense<0.000000e+00> : vector<8xf32>
    %21 = vector.multi_reduction <add>, %20, %cst_10 [1] : vector<8x128xf32> to vector<8xf32>
    %22 = vector.shape_cast %21 : vector<8xf32> to vector<8x1xf32>
    %23 = arith.subf %14, %22 : vector<8x1xf32>
    %24 = vector.shape_cast %23 : vector<8x1xf32> to vector<1x8x1xf32>
    %cst_11 = arith.constant dense<0.000000e+00> : vector<1xf32>
    %25 = vector.multi_reduction <add>, %24, %cst_11 [1, 2] : vector<1x8x1xf32> to vector<1xf32>
    %26 = vector.shape_cast %25 : vector<1xf32> to vector<1x1x1xf32>
    %27 = vector.extract %26[0, 0, 0] : f32 from vector<1x1x1xf32>
    %28 = vector.broadcast %27 : f32 to vector<1x128xf32>
    %c0_12 = arith.constant 0 : index
    %c0_13 = arith.constant 0 : index
    %29 = vector.load %arg6[%c0_12, %c0_13] : memref<1x128xf32, #tpu.memory_space<vmem>>, vector<1x128xf32>
    tpu.vector_store %arg6[%c0_12, %c0_13], %28 {strides = array<i32>} : memref<1x128xf32, #tpu.memory_space<vmem>>, vector<1x128xf32>,
    return
  }
  func.func @transform_0(%arg0: i32, %arg1: i32) -> (i32, i32) {
    %c0_i32 = arith.constant 0 : i32
    return %arg0, %arg1 : i32, i32
  }
  func.func @transform_1(%arg0: i32, %arg1: i32) -> (i32, i32) {
    %c0_i32 = arith.constant 0 : i32
    %c0_i32_0 = arith.constant 0 : i32
    return %arg1, %c0_i32 : i32, i32
  }
  func.func @transform_2(%arg0: i32, %arg1: i32) -> (i32, i32) {
    %c0_i32 = arith.constant 0 : i32
    %c0_i32_0 = arith.constant 0 : i32
    %c0_i32_1 = arith.constant 0 : i32
    return %c0_i32, %c0_i32_0 : i32, i32
  }
  func.func @transform_3(%arg0: i32, %arg1: i32) -> (i32, i32) {
    %c0_i32 = arith.constant 0 : i32
    %c0_i32_0 = arith.constant 0 : i32
    return %arg0, %c0_i32 : i32, i32
  }
  func.func @transform_4(%arg0: i32, %arg1: i32) -> (i32, i32) {
    %c0_i32 = arith.constant 0 : i32
    %c0_i32_0 = arith.constant 0 : i32
    return %c0_i32, %arg0 : i32, i32
  }
}

</mosaic_0001>

<llo_original>
// kernel: tpu_custom_call.1
$region0: #{tpu_custom_call.1}
  #allocation0 [shape = 'u32[]', space=smem, size = 0x4, offset = 0x4, fixed_abs, tag = 'smem constant byte address 0x4 - core index']
  #allocation1 [shape = 'u32[72,128]{1,0:T(1,128)}', space=vmem, size = 0x9000, scoped, tag = 'internal scratch']
  %s0 = inlined_call_operand.vmem [shape: f32[8,128], index: 0, kind: input, shape index: {}]
  %s1 = inlined_call_operand.hbm [shape: f32[128,128], index: 1, kind: input, shape index: {}]
  %s2 = inlined_call_operand.vmem [shape: f32[1,128], index: 2, kind: input, shape index: {}]
  %s3 = inlined_call_operand.vmem [shape: s32[8,1], index: 3, kind: input, shape index: {}]
  %s4 = inlined_call_operand.hbm [shape: f32[1,128], index: 4, kind: output, shape index: {}]
  %s5 = sld [smem:[#allocation0]]
  $region30: #{tpu_custom_call.1} parent=0
    _
  %s7 = ssub.s32 1, %s5
  %s8 = scalar_select 0, %s7, %s5
  $region1: #{tpu_custom_call.1} parent=0
    #allocation2 [shape = 'u8[65536]{0}', space=vmem, size = 0x10000, scoped, tag = 'input window, operand 1, single buffered']
    #allocation3 [shape = 's32[1]{0}', space=sflag, size = 0x4, scoped, tag = 'scoped memory for tpu_custom_call.1']
    #allocation4 [shape = 's32[1]{0}', space=sflag, size = 0x4, scoped, tag = 'scoped memory for tpu_custom_call.1']
    #allocation5 [shape = 'u8[512]{0}', space=vmem, size = 0x400, scoped, tag = 'output window, operand 0, single buffered']
    %9 = vsyncpa [#allocation3], 0
    %10 = vsyncpa [#allocation4], 0
    // Predicated region
    $region2: #{tpu_custom_call.1} parent=1 // pred_check
      _
    $region3: #{tpu_custom_call.1} parent=1 // pred_check_branch
      %12 = sbr.rel (0) target = $region5
    $region4: #{tpu_custom_call.1} parent=1 // pred_region
      _
    $region5: #{tpu_custom_call.1} parent=1 // pred_fallthru
      _
    // Predicated region
    $region6: #{tpu_custom_call.1} parent=1 // pred_check
      _
    $region7: #{tpu_custom_call.1} parent=1 // pred_check_branch
      %14 = sbr.rel (0) target = $region9
    $region8: #{tpu_custom_call.1} parent=1 // pred_region
      %16 = vsyncadd [#allocation3], 0
      %s17 = sshll.u32 %s1, 4
      %s18 = int_to_ptr.hbm [resolvable:$true] %s17
      %s19 = sshll.u32 [#allocation2], 4
      %s20 = int_to_ptr.vmem [resolvable:$true] %s19
      %25 = dma.hbm_to_vmem [thread:$0]  %s18, 2048, %s20, [#allocation3], 128, 128, 8
    $region9: #{tpu_custom_call.1} parent=1 // pred_fallthru
      _
    // Predicated region
    $region10: #{tpu_custom_call.1} parent=1 // pred_check
      _
    $region11: #{tpu_custom_call.1} parent=1 // pred_check_branch
      %27 = sbr.rel (0) target = $region13
    $region12: #{tpu_custom_call.1} parent=1 // pred_region
      _
    $region13: #{tpu_custom_call.1} parent=1 // pred_fallthru
      _
    // Predicated region
    $region14: #{tpu_custom_call.1} parent=1 // pred_check
      _
    $region15: #{tpu_custom_call.1} parent=1 // pred_check_branch
      %29 = sbr.rel (0) target = $region17
    $region16: #{tpu_custom_call.1} parent=1 // pred_region
      _
    $region17: #{tpu_custom_call.1} parent=1 // pred_fallthru
      _
    // Predicated region
    $region18: #{tpu_custom_call.1} parent=1 // pred_check
      _
    $region19: #{tpu_custom_call.1} parent=1 // pred_check_branch
      %31 = sbr.rel (0) target = $region21
    $region20: #{tpu_custom_call.1} parent=1 // pred_region
      %33 = dma.done [#allocation3], 2048
    $region21: #{tpu_custom_call.1} parent=1 // pred_fallthru
      _
    %v34 = vld [vmem:[%s0] sm:$0xff]
    %v35 = vld [vmem:[#allocation2] sm:$0xff]
    %v36 = vld [vmem:[#allocation2 + $0x8] sm:$0xff]
    %v37 = vld [vmem:[#allocation2 + $0x10] sm:$0xff]
    %v38 = vld [vmem:[#allocation2 + $0x18] sm:$0xff]
    %v39 = vld [vmem:[#allocation2 + $0x20] sm:$0xff]
    %v40 = vld [vmem:[#allocation2 + $0x28] sm:$0xff]
    %v41 = vld [vmem:[#allocation2 + $0x30] sm:$0xff]
    %v42 = vld [vmem:[#allocation2 + $0x38] sm:$0xff]
    %v43 = vld [vmem:[#allocation2 + $0x40] sm:$0xff]
    %v44 = vld [vmem:[#allocation2 + $0x48] sm:$0xff]
    %v45 = vld [vmem:[#allocation2 + $0x50] sm:$0xff]
    %v46 = vld [vmem:[#allocation2 + $0x58] sm:$0xff]
    %v47 = vld [vmem:[#allocation2 + $0x60] sm:$0xff]
    %v48 = vld [vmem:[#allocation2 + $0x68] sm:$0xff]
    %v49 = vld [vmem:[#allocation2 + $0x70] sm:$0xff]
    %v50 = vld [vmem:[#allocation2 + $0x78] sm:$0xff]
    %v51 = vld [vmem:[%s2] sm:$0x1]
    %v53 = vperm.slane %v51, 0
    %v55 = vand.u32 %v50, 4294901760
    %56 = vmatpush.msra.mxu0 %v55
    %v57 = vand.u32 %v49, 4294901760
    %58 = vmatpush.msra.mxu0 %v57
    %v59 = vand.u32 %v48, 4294901760
    %60 = vmatpush.msra.mxu0 %v59
    %v61 = vand.u32 %v47, 4294901760
    %62 = vmatpush.msra.mxu0 %v61
    %v63 = vand.u32 %v46, 4294901760
    %64 = vmatpush.msra.mxu0 %v63
    %v65 = vand.u32 %v45, 4294901760
    %66 = vmatpush.msra.mxu0 %v65
    %v67 = vand.u32 %v44, 4294901760
    %68 = vmatpush.msra.mxu0 %v67
    %v69 = vand.u32 %v43, 4294901760
    %70 = vmatpush.msra.mxu0 %v69
    %v71 = vand.u32 %v42, 4294901760
    %72 = vmatpush.msra.mxu0 %v71
    %v73 = vand.u32 %v41, 4294901760
    %74 = vmatpush.msra.mxu0 %v73
    %v75 = vand.u32 %v40, 4294901760
    %76 = vmatpush.msra.mxu0 %v75
    %v77 = vand.u32 %v39, 4294901760
    %78 = vmatpush.msra.mxu0 %v77
    %v79 = vand.u32 %v38, 4294901760
    %80 = vmatpush.msra.mxu0 %v79
    %v81 = vand.u32 %v37, 4294901760
    %82 = vmatpush.msra.mxu0 %v81
    %v83 = vand.u32 %v36, 4294901760
    %84 = vmatpush.msra.mxu0 %v83
    %v85 = vand.u32 %v35, 4294901760
    %86 = vmatpush.msra.mxu0 %v85
    %v87 = vand.u32 %v34, 4294901760
    %v88 = vsub.f32 %v34, %v87
    %v89 = vand.u32 %v88, 4294901760
    %v90 = vsub.f32 %v88, %v89
    %v91 = vand.u32 %v90, 4294901760
    %92 = vmatmul.f32.gmra.mxu0 %v91
    %v93 = vpop.f32.mrf.mxu0
    %v94 = vadd.f32 %v53, %v93
    %95 = vdwg.mxu0
    %v96 = vand.u32 %v50, 4294901760
    %v97 = vsub.f32 %v50, %v96
    %v98 = vand.u32 %v97, 4294901760
    %v99 = vsub.f32 %v97, %v98
    %v100 = vand.u32 %v99, 4294901760
    %101 = vmatpush.msra.mxu0 %v100
    %v102 = vand.u32 %v49, 4294901760
    %v103 = vsub.f32 %v49, %v102
    %v104 = vand.u32 %v103, 4294901760
    %v105 = vsub.f32 %v103, %v104
    %v106 = vand.u32 %v105, 4294901760
    %107 = vmatpush.msra.mxu0 %v106
    %v108 = vand.u32 %v48, 4294901760
    %v109 = vsub.f32 %v48, %v108
    %v110 = vand.u32 %v109, 4294901760
    %v111 = vsub.f32 %v109, %v110
    %v112 = vand.u32 %v111, 4294901760
    %113 = vmatpush.msra.mxu0 %v112
    %v114 = vand.u32 %v47, 4294901760
    %v115 = vsub.f32 %v47, %v114
    %v116 = vand.u32 %v115, 4294901760
    %v117 = vsub.f32 %v115, %v116
    %v118 = vand.u32 %v117, 4294901760
    %119 = vmatpush.msra.mxu0 %v118
    %v120 = vand.u32 %v46, 4294901760
    %v121 = vsub.f32 %v46, %v120
    %v122 = vand.u32 %v121, 4294901760
    %v123 = vsub.f32 %v121, %v122
    %v124 = vand.u32 %v123, 4294901760
    %125 = vmatpush.msra.mxu0 %v124
    %v126 = vand.u32 %v45, 4294901760
    %v127 = vsub.f32 %v45, %v126
    %v128 = vand.u32 %v127, 4294901760
    %v129 = vsub.f32 %v127, %v128
    %v130 = vand.u32 %v129, 4294901760
    %131 = vmatpush.msra.mxu0 %v130
    %v132 = vand.u32 %v44, 4294901760
    %v133 = vsub.f32 %v44, %v132
    %v134 = vand.u32 %v133, 4294901760
    %v135 = vsub.f32 %v133, %v134
    %v136 = vand.u32 %v135, 4294901760
    %137 = vmatpush.msra.mxu0 %v136
    %v138 = vand.u32 %v43, 4294901760
    %v139 = vsub.f32 %v43, %v138
    %v140 = vand.u32 %v139, 4294901760
    %v141 = vsub.f32 %v139, %v140
    %v142 = vand.u32 %v141, 4294901760
    %143 = vmatpush.msra.mxu0 %v142
    %v144 = vand.u32 %v42, 4294901760
    %v145 = vsub.f32 %v42, %v144
    %v146 = vand.u32 %v145, 4294901760
    %v147 = vsub.f32 %v145, %v146
    %v148 = vand.u32 %v147, 4294901760
    %149 = vmatpush.msra.mxu0 %v148
    %v150 = vand.u32 %v41, 4294901760
    %v151 = vsub.f32 %v41, %v150
    %v152 = vand.u32 %v151, 4294901760
    %v153 = vsub.f32 %v151, %v152
    %v154 = vand.u32 %v153, 4294901760
    %155 = vmatpush.msra.mxu0 %v154
    %v156 = vand.u32 %v40, 4294901760
    %v157 = vsub.f32 %v40, %v156
    %v158 = vand.u32 %v157, 4294901760
    %v159 = vsub.f32 %v157, %v158
    %v160 = vand.u32 %v159, 4294901760
    %161 = vmatpush.msra.mxu0 %v160
    %v162 = vand.u32 %v39, 4294901760
    %v163 = vsub.f32 %v39, %v162
    %v164 = vand.u32 %v163, 4294901760
    %v165 = vsub.f32 %v163, %v164
    %v166 = vand.u32 %v165, 4294901760
    %167 = vmatpush.msra.mxu0 %v166
    %v168 = vand.u32 %v38, 4294901760
    %v169 = vsub.f32 %v38, %v168
    %v170 = vand.u32 %v169, 4294901760
    %v171 = vsub.f32 %v169, %v170
    %v172 = vand.u32 %v171, 4294901760
    %173 = vmatpush.msra.mxu0 %v172
    %v174 = vand.u32 %v37, 4294901760
    %v175 = vsub.f32 %v37, %v174
    %v176 = vand.u32 %v175, 4294901760
    %v177 = vsub.f32 %v175, %v176
    %v178 = vand.u32 %v177, 4294901760
    %179 = vmatpush.msra.mxu0 %v178
    %v180 = vand.u32 %v36, 4294901760
    %v181 = vsub.f32 %v36, %v180
    %v182 = vand.u32 %v181, 4294901760
    %v183 = vsub.f32 %v181, %v182
    %v184 = vand.u32 %v183, 4294901760
    %185 = vmatpush.msra.mxu0 %v184
    %v186 = vand.u32 %v35, 4294901760
    %v187 = vsub.f32 %v35, %v186
    %v188 = vand.u32 %v187, 4294901760
    %v189 = vsub.f32 %v187, %v188
    %v190 = vand.u32 %v189, 4294901760
    %191 = vmatpush.msra.mxu0 %v190
    %v192 = vand.u32 %v34, 4294901760
    %193 = vmatmul.f32.gmra.mxu0 %v192
    %v194 = vpop.f32.mrf.mxu0
    %v195 = vadd.f32 %v94, %v194
    %196 = vdwg.mxu0
    %v197 = vand.u32 %v50, 4294901760
    %v198 = vsub.f32 %v50, %v197
    %199 = vmatpush.msra.mxu0 %v198
    %v200 = vand.u32 %v49, 4294901760
    %v201 = vsub.f32 %v49, %v200
    %202 = vmatpush.msra.mxu0 %v201
    %v203 = vand.u32 %v48, 4294901760
    %v204 = vsub.f32 %v48, %v203
    %205 = vmatpush.msra.mxu0 %v204
    %v206 = vand.u32 %v47, 4294901760
    %v207 = vsub.f32 %v47, %v206
    %208 = vmatpush.msra.mxu0 %v207
    %v209 = vand.u32 %v46, 4294901760
    %v210 = vsub.f32 %v46, %v209
    %211 = vmatpush.msra.mxu0 %v210
    %v212 = vand.u32 %v45, 4294901760
    %v213 = vsub.f32 %v45, %v212
    %214 = vmatpush.msra.mxu0 %v213
    %v215 = vand.u32 %v44, 4294901760
    %v216 = vsub.f32 %v44, %v215
    %217 = vmatpush.msra.mxu0 %v216
    %v218 = vand.u32 %v43, 4294901760
    %v219 = vsub.f32 %v43, %v218
    %220 = vmatpush.msra.mxu0 %v219
    %v221 = vand.u32 %v42, 4294901760
    %v222 = vsub.f32 %v42, %v221
    %223 = vmatpush.msra.mxu0 %v222
    %v224 = vand.u32 %v41, 4294901760
    %v225 = vsub.f32 %v41, %v224
    %226 = vmatpush.msra.mxu0 %v225
    %v227 = vand.u32 %v40, 4294901760
    %v228 = vsub.f32 %v40, %v227
    %229 = vmatpush.msra.mxu0 %v228
    %v230 = vand.u32 %v39, 4294901760
    %v231 = vsub.f32 %v39, %v230
    %232 = vmatpush.msra.mxu0 %v231
    %v233 = vand.u32 %v38, 4294901760
    %v234 = vsub.f32 %v38, %v233
    %235 = vmatpush.msra.mxu0 %v234
    %v236 = vand.u32 %v37, 4294901760
    %v237 = vsub.f32 %v37, %v236
    %238 = vmatpush.msra.mxu0 %v237
    %v239 = vand.u32 %v36, 4294901760
    %v240 = vsub.f32 %v36, %v239
    %241 = vmatpush.msra.mxu0 %v240
    %v242 = vand.u32 %v35, 4294901760
    %v243 = vsub.f32 %v35, %v242
    %244 = vmatpush.msra.mxu0 %v243
    %v245 = vand.u32 %v34, 4294901760
    %v246 = vsub.f32 %v34, %v245
    %247 = vmatmul.f32.gmra.mxu0 %v246
    %v248 = vpop.f32.mrf.mxu0
    %v249 = vadd.f32 %v195, %v248
    %250 = vdwg.mxu0
    %v251 = vand.u32 %v50, 4294901760
    %252 = vmatpush.msra.mxu0 %v251
    %v253 = vand.u32 %v49, 4294901760
    %254 = vmatpush.msra.mxu0 %v253
    %v255 = vand.u32 %v48, 4294901760
    %256 = vmatpush.msra.mxu0 %v255
    %v257 = vand.u32 %v47, 4294901760
    %258 = vmatpush.msra.mxu0 %v257
    %v259 = vand.u32 %v46, 4294901760
    %260 = vmatpush.msra.mxu0 %v259
    %v261 = vand.u32 %v45, 4294901760
    %262 = vmatpush.msra.mxu0 %v261
    %v263 = vand.u32 %v44, 4294901760
    %264 = vmatpush.msra.mxu0 %v263
    %v265 = vand.u32 %v43, 4294901760
    %266 = vmatpush.msra.mxu0 %v265
    %v267 = vand.u32 %v42, 4294901760
    %268 = vmatpush.msra.mxu0 %v267
    %v269 = vand.u32 %v41, 4294901760
    %270 = vmatpush.msra.mxu0 %v269
    %v271 = vand.u32 %v40, 4294901760
    %272 = vmatpush.msra.mxu0 %v271
    %v273 = vand.u32 %v39, 4294901760
    %274 = vmatpush.msra.mxu0 %v273
    %v275 = vand.u32 %v38, 4294901760
    %276 = vmatpush.msra.mxu0 %v275
    %v277 = vand.u32 %v37, 4294901760
    %278 = vmatpush.msra.mxu0 %v277
    %v279 = vand.u32 %v36, 4294901760
    %280 = vmatpush.msra.mxu0 %v279
    %v281 = vand.u32 %v35, 4294901760
    %282 = vmatpush.msra.mxu0 %v281
    %v283 = vand.u32 %v34, 4294901760
    %v284 = vsub.f32 %v34, %v283
    %v285 = vand.u32 %v284, 4294901760
    %286 = vmatmul.f32.gmra.mxu0 %v285
    %v287 = vpop.f32.mrf.mxu0
    %v288 = vadd.f32 %v249, %v287
    %289 = vdwg.mxu0
    %v290 = vand.u32 %v50, 4294901760
    %v291 = vsub.f32 %v50, %v290
    %v292 = vand.u32 %v291, 4294901760
    %293 = vmatpush.msra.mxu0 %v292
    %v294 = vand.u32 %v49, 4294901760
    %v295 = vsub.f32 %v49, %v294
    %v296 = vand.u32 %v295, 4294901760
    %297 = vmatpush.msra.mxu0 %v296
    %v298 = vand.u32 %v48, 4294901760
    %v299 = vsub.f32 %v48, %v298
    %v300 = vand.u32 %v299, 4294901760
    %301 = vmatpush.msra.mxu0 %v300
    %v302 = vand.u32 %v47, 4294901760
    %v303 = vsub.f32 %v47, %v302
    %v304 = vand.u32 %v303, 4294901760
    %305 = vmatpush.msra.mxu0 %v304
    %v306 = vand.u32 %v46, 4294901760
    %v307 = vsub.f32 %v46, %v306
    %v308 = vand.u32 %v307, 4294901760
    %309 = vmatpush.msra.mxu0 %v308
    %v310 = vand.u32 %v45, 4294901760
    %v311 = vsub.f32 %v45, %v310
    %v312 = vand.u32 %v311, 4294901760
    %313 = vmatpush.msra.mxu0 %v312
    %v314 = vand.u32 %v44, 4294901760
    %v315 = vsub.f32 %v44, %v314
    %v316 = vand.u32 %v315, 4294901760
    %317 = vmatpush.msra.mxu0 %v316
    %v318 = vand.u32 %v43, 4294901760
    %v319 = vsub.f32 %v43, %v318
    %v320 = vand.u32 %v319, 4294901760
    %321 = vmatpush.msra.mxu0 %v320
    %v322 = vand.u32 %v42, 4294901760
    %v323 = vsub.f32 %v42, %v322
    %v324 = vand.u32 %v323, 4294901760
    %325 = vmatpush.msra.mxu0 %v324
    %v326 = vand.u32 %v41, 4294901760
    %v327 = vsub.f32 %v41, %v326
    %v328 = vand.u32 %v327, 4294901760
    %329 = vmatpush.msra.mxu0 %v328
    %v330 = vand.u32 %v40, 4294901760
    %v331 = vsub.f32 %v40, %v330
    %v332 = vand.u32 %v331, 4294901760
    %333 = vmatpush.msra.mxu0 %v332
    %v334 = vand.u32 %v39, 4294901760
    %v335 = vsub.f32 %v39, %v334
    %v336 = vand.u32 %v335, 4294901760
    %337 = vmatpush.msra.mxu0 %v336
    %v338 = vand.u32 %v38, 4294901760
    %v339 = vsub.f32 %v38, %v338
    %v340 = vand.u32 %v339, 4294901760
    %341 = vmatpush.msra.mxu0 %v340
    %v342 = vand.u32 %v37, 4294901760
    %v343 = vsub.f32 %v37, %v342
    %v344 = vand.u32 %v343, 4294901760
    %345 = vmatpush.msra.mxu0 %v344
    %v346 = vand.u32 %v36, 4294901760
    %v347 = vsub.f32 %v36, %v346
    %v348 = vand.u32 %v347, 4294901760
    %349 = vmatpush.msra.mxu0 %v348
    %v350 = vand.u32 %v35, 4294901760
    %v351 = vsub.f32 %v35, %v350
    %v352 = vand.u32 %v351, 4294901760
    %353 = vmatpush.msra.mxu0 %v352
    %v354 = vand.u32 %v34, 4294901760
    %355 = vmatmul.f32.gmra.mxu0 %v354
    %v356 = vpop.f32.mrf.mxu0
    %v357 = vadd.f32 %v288, %v356
    %358 = vdwg.mxu0
    %v359 = vand.u32 %v50, 4294901760
    %360 = vmatpush.msra.mxu0 %v359
    %v361 = vand.u32 %v49, 4294901760
    %362 = vmatpush.msra.mxu0 %v361
    %v363 = vand.u32 %v48, 4294901760
    %364 = vmatpush.msra.mxu0 %v363
    %v365 = vand.u32 %v47, 4294901760
    %366 = vmatpush.msra.mxu0 %v365
    %v367 = vand.u32 %v46, 4294901760
    %368 = vmatpush.msra.mxu0 %v367
    %v369 = vand.u32 %v45, 4294901760
    %370 = vmatpush.msra.mxu0 %v369
    %v371 = vand.u32 %v44, 4294901760
    %372 = vmatpush.msra.mxu0 %v371
    %v373 = vand.u32 %v43, 4294901760
    %374 = vmatpush.msra.mxu0 %v373
    %v375 = vand.u32 %v42, 4294901760
    %376 = vmatpush.msra.mxu0 %v375
    %v377 = vand.u32 %v41, 4294901760
    %378 = vmatpush.msra.mxu0 %v377
    %v379 = vand.u32 %v40, 4294901760
    %380 = vmatpush.msra.mxu0 %v379
    %v381 = vand.u32 %v39, 4294901760
    %382 = vmatpush.msra.mxu0 %v381
    %v383 = vand.u32 %v38, 4294901760
    %384 = vmatpush.msra.mxu0 %v383
    %v385 = vand.u32 %v37, 4294901760
    %386 = vmatpush.msra.mxu0 %v385
    %v387 = vand.u32 %v36, 4294901760
    %388 = vmatpush.msra.mxu0 %v387
    %v389 = vand.u32 %v35, 4294901760
    %390 = vmatpush.msra.mxu0 %v389
    %v391 = vand.u32 %v34, 4294901760
    %392 = vmatmul.f32.gmra.mxu0 %v391
    %v393 = vpop.f32.mrf.mxu0
    %v394 = vadd.f32 %v357, %v393
    %395 = vdwg.mxu0
    %396 = vmax.xlane.f32.xlu0 %v394
    %v397 = vpop.xlane.xlu0 %396
    %v398 = vsub.f32 %v394, %v397
    %v399 = vmul.f32 %v398, 1.442695
    %v400 = vpow.pop %v399
    %401 = vadd.xlane.f32.xlu0 %v400
    %v402 = vpop.xlane.xlu0 %401
    %v403 = vlog2.pop %v402
    %v404 = vmul.f32 %v403, 0.6931472
    %v405 = vadd.f32 %v397, %v404
    %v406 = vlaneseq
    %v407 = vand.u32 %v406, 127
    %v408 = vld [vmem:[%s3] sm:$0xff]
    %409 = vset.pattern.permute.xlu0 0
    %410 = vperm.xlu0 %409, %v408
    %v411 = vpop.permute.xlu0 %410
    %vm412 = vcmp.eq.s32.totalorder %v407, %v411
    %v413 = vsel %vm412, %v394, 0.0
    %414 = vadd.xlane.f32.xlu0 %v413
    %v415 = vpop.xlane.xlu0 %414
    %v416 = vsub.f32 %v405, %v415
    %vm417 = vcmask 7168
    %v418 = vsel %vm417, %v416, 0.0
    %419 = vadd.xlane.f32.xlu0 %v418
    %v420 = vpop.xlane.xlu0 %419
    %v421 = vrot.slane %v420, 4
    %v422 = vadd.f32 %v420, %v421
    %v423 = vrot.slane %v422, 2
    %v424 = vadd.f32 %v422, %v423
    %v425 = vrot.slane %v424, 1
    %v426 = vadd.f32 %v424, %v425
    %s427 = vtos %v426
    %v428 = vstv %s427
    %429 = vst [vmem:[#allocation5] sm:$0x1] %v428
    // Predicated region
    $region22: #{tpu_custom_call.1} parent=1 // pred_check
      _
    $region23: #{tpu_custom_call.1} parent=1 // pred_check_branch
      %431 = sbr.rel (0) target = $region25
    $region24: #{tpu_custom_call.1} parent=1 // pred_region
      %433 = vsyncadd [#allocation4], 0
      %s435 = sshll.u32 [#allocation5], 4
      %s436 = int_to_ptr.vmem [resolvable:$true] %s435
      %s437 = sshll.u32 %s4, 4
      %s438 = int_to_ptr.hbm [resolvable:$true] %s437
      %440 = dma.vmem_to_hbm [thread:$0]  %s436, 16, %s438, [#allocation4]
    $region25: #{tpu_custom_call.1} parent=1 // pred_fallthru
      _
    // Predicated region
    $region26: #{tpu_custom_call.1} parent=1 // pred_check
      _
    $region27: #{tpu_custom_call.1} parent=1 // pred_check_branch
      %442 = sbr.rel (0) target = $region29
    $region28: #{tpu_custom_call.1} parent=1 // pred_region
      %444 = dma.done [#allocation4], 16
    $region29: #{tpu_custom_call.1} parent=1 // pred_fallthru
      _
    %445 = vsyncpa [#allocation3], 1
    %446 = vsyncpa [#allocation4], 1

</llo_original>
